<compile_context>
chip_gen: v7x
topology: tpu7x:2x2x1
jax: 0.10.0
libtpu: 0.0.40
codegen_flags: <defaults>
</compile_context>

<pallas_src>
import functools

import jax
import jax.numpy as jnp
from jax.experimental import pallas as pl
from jax.experimental.pallas import tpu as pltpu


def _round_up(n, m):
    return ((n + m - 1) // m) * m


# ----------------------------------------------------------------------------
# Kernel
# ----------------------------------------------------------------------------
def vae_kernel(
    x_ref,
    w1e_ref, b1e_ref,
    w2e_ref, b2e_ref,
    wmulv_ref, bmulv_ref,
    eps_ref,
    w1d_ref, b1d_ref,
    w2d_ref, b2d_ref,
    w3d_ref, b3d_ref,
    recon_ref, mulv_ref,
    *, lp,
):
    """One batch tile: encoder -> reparameterize -> decoder, all lane-dense."""

    def mm(a, w_ref, b_ref):
        # Cast activation to the (possibly bf16) weight dtype for the MXU,
        # accumulate in f32, add f32 bias.
        return (
            jnp.dot(a.astype(w_ref.dtype), w_ref[...],
                    preferred_element_type=jnp.float32)
            + b_ref[...]
        )

    x = x_ref[...]

    # ---- Encoder ----
    h1 = jnp.maximum(mm(x, w1e_ref, b1e_ref), 0.0)
    h2 = jnp.maximum(mm(h1, w2e_ref, b2e_ref), 0.0)

    # Fused mu|logvar projection: lanes [0:lp) = mu, [lp:2*lp) = logvar.
    mulv = mm(h2, wmulv_ref, bmulv_ref)
    mu = mulv[:, :lp]
    logvar = mulv[:, lp:]

    # ---- Reparameterize: z = mu + eps * exp(0.5 * logvar)  (f32 elementwise) ----
    std = jnp.exp(0.5 * logvar)
    z = mu + eps_ref[...] * std

    # ---- Decoder ----
    d1 = jnp.maximum(mm(z, w1d_ref, b1d_ref), 0.0)
    d2 = jnp.maximum(mm(d1, w2d_ref, b2d_ref), 0.0)
    logits = mm(d2, w3d_ref, b3d_ref)
    recon = jax.nn.sigmoid(logits)

    recon_ref[...] = recon.astype(recon_ref.dtype)
    mulv_ref[...] = mulv.astype(mulv_ref.dtype)


# ----------------------------------------------------------------------------
# Parameter init (PyTorch-equivalent, stored pre-transposed [in, out]) + padding
# ----------------------------------------------------------------------------
def init_linear(key, in_f, out_f):
    kw, kb = jax.random.split(key)
    bound = 1.0 / jnp.sqrt(jnp.float32(in_f))
    w = jax.random.uniform(kw, (in_f, out_f), jnp.float32, -bound, bound)
    b = jax.random.uniform(kb, (1, out_f), jnp.float32, -bound, bound)
    return w, b


def init_params(key, input_size=140, latent_dim=8):
    keys = jax.random.split(key, 7)
    p = {}
    p["w1e"], p["b1e"] = init_linear(keys[0], input_size, 32)
    p["w2e"], p["b2e"] = init_linear(keys[1], 32, 16)
    p["wmu"], p["bmu"] = init_linear(keys[2], 16, latent_dim)
    p["wlv"], p["blv"] = init_linear(keys[3], 16, latent_dim)
    p["w1d"], p["b1d"] = init_linear(keys[4], latent_dim, 16)
    p["w2d"], p["b2d"] = init_linear(keys[5], 16, 32)
    p["w3d"], p["b3d"] = init_linear(keys[6], 32, input_size)
    return p


def pad_params(params, input_size=140, latent_dim=8, weight_dtype=jnp.float32):
    """Zero-pad weights to lane-dense shapes; fuse mu/logvar projection.

    Weights are stored in `weight_dtype` (use bf16 on v6e/v7x); biases stay f32.
    Zero padding is exact: padded lanes/rows contribute 0 to every dot product.
    """
    FP = _round_up(input_size, 128)
    LP = _round_up(latent_dim, 128)
    H1, H2 = 32, 16
    H1P, H2P = 128, 128

    def padw(w, ip, op):
        return (jnp.zeros((ip, op), weight_dtype)
                .at[: w.shape[0], : w.shape[1]].set(w.astype(weight_dtype)))

    def padb(b, op):
        return jnp.zeros((1, op), jnp.float32).at[:, : b.shape[1]].set(b)

    p = {}
    p["w1e"], p["b1e"] = padw(params["w1e"], FP, H1P), padb(params["b1e"], H1P)
    p["w2e"], p["b2e"] = padw(params["w2e"], H1P, H2P), padb(params["b2e"], H2P)

    wmulv = jnp.zeros((H2P, 2 * LP), weight_dtype)
    wmulv = wmulv.at[:H2, :latent_dim].set(params["wmu"].astype(weight_dtype))
    wmulv = wmulv.at[:H2, LP:LP + latent_dim].set(params["wlv"].astype(weight_dtype))
    bmulv = jnp.zeros((1, 2 * LP), jnp.float32)
    bmulv = bmulv.at[:, :latent_dim].set(params["bmu"])
    bmulv = bmulv.at[:, LP:LP + latent_dim].set(params["blv"])
    p["wmulv"], p["bmulv"] = wmulv, bmulv

    p["w1d"], p["b1d"] = padw(params["w1d"], LP, H2P), padb(params["b1d"], H2P)
    p["w2d"], p["b2d"] = padw(params["w2d"], H2P, H1P), padb(params["b2d"], H1P)
    p["w3d"], p["b3d"] = padw(params["w3d"], H1P, FP), padb(params["b3d"], FP)
    return p


# ----------------------------------------------------------------------------
# Wrapper
# ----------------------------------------------------------------------------
def vae_forward(x, padded_params, eps, *, input_size, latent_dim, tb=None):
    """x: [B, input_size] f32; eps: [B, latent_dim] f32 -> (recon, mu, logvar)."""
    B = x.shape[0]
    p = padded_params
    FP = p["w1e"].shape[0]
    LP = p["w1d"].shape[0]

    # Batch tile: big tiles amortize the ~0.35us/step overhead; capped at 256
    # (good for v6e/v7x MXU rows, fine for v5e). Must be a multiple of 8.
    if tb is None:
        tb = min(256, _round_up(B, 8))
    tb = _round_up(tb, 8)
    BP = _round_up(B, tb)

    # Zero-pad inputs (padded rows/lanes are mathematically inert).
    xp = jnp.zeros((BP, FP), jnp.float32).at[:B, :input_size].set(x)
    epsp = jnp.zeros((BP, LP), jnp.float32).at[:B, :latent_dim].set(eps)

    inputs = (
        xp,
        p["w1e"], p["b1e"],
        p["w2e"], p["b2e"],
        p["wmulv"], p["bmulv"],
        epsp,
        p["w1d"], p["b1d"],
        p["w2d"], p["b2d"],
        p["w3d"], p["b3d"],
    )

    def const_spec(arr):
        # Full-array block, constant index -> stays resident in VMEM across steps.
        return pl.BlockSpec(arr.shape, lambda i, _nd=arr.ndim: (0,) * _nd)

    in_specs = [
        pl.BlockSpec((tb, FP), lambda i: (i, 0)),       # x tile
        const_spec(p["w1e"]), const_spec(p["b1e"]),
        const_spec(p["w2e"]), const_spec(p["b2e"]),
        const_spec(p["wmulv"]), const_spec(p["bmulv"]),
        pl.BlockSpec((tb, LP), lambda i: (i, 0)),       # eps tile
        const_spec(p["w1d"]), const_spec(p["b1d"]),
        const_spec(p["w2d"]), const_spec(p["b2d"]),
        const_spec(p["w3d"]), const_spec(p["b3d"]),
    ]
    out_specs = (
        pl.BlockSpec((tb, FP), lambda i: (i, 0)),        # recon (padded)
        pl.BlockSpec((tb, 2 * LP), lambda i: (i, 0)),    # fused mu|logvar
    )
    out_shapes = (
        jax.ShapeDtypeStruct((BP, FP), jnp.float32),
        jax.ShapeDtypeStruct((BP, 2 * LP), jnp.float32),
    )

    recon_p, mulv_p = pl.pallas_call(
        functools.partial(vae_kernel, lp=LP),
        out_shape=out_shapes,
        grid=(BP // tb,),
        in_specs=in_specs,
        out_specs=out_specs,
        compiler_params=pltpu.CompilerParams(
            dimension_semantics=("parallel",),  # megacore split on v7x
        ),
    )(*inputs)

    recon = recon_p[:B, :input_size]
    mu = mulv_p[:B, :latent_dim]
    logvar = mulv_p[:B, LP:LP + latent_dim]
    return recon, mu, logvar


# ----------------------------------------------------------------------------
# Pure-JAX reference (unpadded) for correctness checks
# ----------------------------------------------------------------------------
def vae_reference(x, params, eps):
    relu = lambda v: jnp.maximum(v, 0.0)
    h1 = relu(x @ params["w1e"] + params["b1e"])
    h2 = relu(h1 @ params["w2e"] + params["b2e"])
    mu = h2 @ params["wmu"] + params["bmu"]
    logvar = h2 @ params["wlv"] + params["blv"]
    z = mu + eps * jnp.exp(0.5 * logvar)
    d1 = relu(z @ params["w1d"] + params["b1d"])
    d2 = relu(d1 @ params["w2d"] + params["b2d"])
    recon = jax.nn.sigmoid(d2 @ params["w3d"] + params["b3d"])
    return recon, mu, logvar


if __name__ == "__main__":
    input_size = 140
    latent_dim = 8

    key = jax.random.PRNGKey(0)
    k_params, k_x, k_eps, k_x2, k_eps2 = jax.random.split(key, 5)
    params = init_params(k_params, input_size=input_size, latent_dim=latent_dim)

    # ---- small batch (B=8), f32 MXU path, strict check ----
    B = 8
    x = jax.random.normal(k_x, (B, input_size), jnp.float32)
    eps = jax.random.normal(k_eps, (B, latent_dim), jnp.float32)

    pp_f32 = pad_params(params, input_size, latent_dim, weight_dtype=jnp.float32)
    recon_x, mu, logvar = vae_forward(
        x, pp_f32, eps, input_size=input_size, latent_dim=latent_dim)
    jax.block_until_ready((recon_x, mu, logvar))

    r_ref, mu_ref, lv_ref = vae_reference(x, params, eps)
    assert jnp.allclose(recon_x, r_ref, atol=1e-4, rtol=1e-4)
    assert jnp.allclose(mu, mu_ref, atol=1e-4, rtol=1e-4)
    assert jnp.allclose(logvar, lv_ref, atol=1e-4, rtol=1e-4)

    # ---- larger batch (B=300 -> padded to 512, grid of 2), exercises the
    #      batch grid, tile padding and resident weights ----
    B2 = 300
    x2 = jax.random.normal(k_x2, (B2, input_size), jnp.float32)
    eps2 = jax.random.normal(k_eps2, (B2, latent_dim), jnp.float32)
    recon2, mu2, lv2 = vae_forward(
        x2, pp_f32, eps2, input_size=input_size, latent_dim=latent_dim)
    jax.block_until_ready((recon2, mu2, lv2))
    r2_ref, mu2_ref, lv2_ref = vae_reference(x2, params, eps2)
    assert jnp.allclose(recon2, r2_ref, atol=1e-4, rtol=1e-4)
    assert jnp.allclose(mu2, mu2_ref, atol=1e-4, rtol=1e-4)
    assert jnp.allclose(lv2, lv2_ref, atol=1e-4, rtol=1e-4)

    # ---- bf16 MXU operands (v6e/v7x fast path), f32 accumulation, loose check ----
    pp_bf16 = pad_params(params, input_size, latent_dim, weight_dtype=jnp.bfloat16)
    recon_b, mu_b, lv_b = vae_forward(
        x2, pp_bf16, eps2, input_size=input_size, latent_dim=latent_dim)
    jax.block_until_ready((recon_b, mu_b, lv_b))
    assert jnp.allclose(recon_b, r2_ref, atol=5e-2, rtol=5e-2)
    assert jnp.allclose(mu_b, mu2_ref, atol=5e-2, rtol=5e-2)
    assert jnp.allclose(lv_b, lv2_ref, atol=5e-2, rtol=5e-2)

    print("KERNEL_OK")
</pallas_src>

<mosaic_0001>
module attributes {stable_mosaic.version = 11 : i64} {
  func.func @vae_kernel(%arg0: i32, %arg1: memref<8x256xf32, #tpu.memory_space<vmem>>, %arg2: memref<256x128xf32, #tpu.memory_space<vmem>>, %arg3: memref<1x128xf32, #tpu.memory_space<vmem>>, %arg4: memref<128x128xf32, #tpu.memory_space<vmem>>, %arg5: memref<1x128xf32, #tpu.memory_space<vmem>>, %arg6: memref<128x256xf32, #tpu.memory_space<vmem>>, %arg7: memref<1x256xf32, #tpu.memory_space<vmem>>, %arg8: memref<8x128xf32, #tpu.memory_space<vmem>>, %arg9: memref<128x128xf32, #tpu.memory_space<vmem>>, %arg10: memref<1x128xf32, #tpu.memory_space<vmem>>, %arg11: memref<128x128xf32, #tpu.memory_space<vmem>>, %arg12: memref<1x128xf32, #tpu.memory_space<vmem>>, %arg13: memref<128x256xf32, #tpu.memory_space<vmem>>, %arg14: memref<1x256xf32, #tpu.memory_space<vmem>>, %arg15: memref<8x256xf32, #tpu.memory_space<vmem>>, %arg16: memref<8x256xf32, #tpu.memory_space<vmem>>) attributes {dimension_semantics = [#tpu.dimension_semantics<parallel>], iteration_bounds = array<i64: 1>, scalar_prefetch = 0 : i64, scratch_operands = 0 : i64, tpu.core_type = #tpu.core_type<tc>, window_params = [{transform_indices = @transform_0, window_bounds = array<i64: 8, 256>}, {pipeline_mode = #tpu.pipeline_mode<synchronous>, transform_indices = @transform_1, window_bounds = array<i64: 256, 128>}, {pipeline_mode = #tpu.pipeline_mode<synchronous>, transform_indices = @transform_2, window_bounds = array<i64: 1, 128>}, {pipeline_mode = #tpu.pipeline_mode<synchronous>, transform_indices = @transform_3, window_bounds = array<i64: 128, 128>}, {pipeline_mode = #tpu.pipeline_mode<synchronous>, transform_indices = @transform_4, window_bounds = array<i64: 1, 128>}, {pipeline_mode = #tpu.pipeline_mode<synchronous>, transform_indices = @transform_5, window_bounds = array<i64: 128, 256>}, {pipeline_mode = #tpu.pipeline_mode<synchronous>, transform_indices = @transform_6, window_bounds = array<i64: 1, 256>}, {transform_indices = @transform_7, window_bounds = array<i64: 8, 128>}, {pipeline_mode = #tpu.pipeline_mode<synchronous>, transform_indices = @transform_8, window_bounds = array<i64: 128, 128>}, {pipeline_mode = #tpu.pipeline_mode<synchronous>, transform_indices = @transform_9, window_bounds = array<i64: 1, 128>}, {pipeline_mode = #tpu.pipeline_mode<synchronous>, transform_indices = @transform_10, window_bounds = array<i64: 128, 128>}, {pipeline_mode = #tpu.pipeline_mode<synchronous>, transform_indices = @transform_11, window_bounds = array<i64: 1, 128>}, {pipeline_mode = #tpu.pipeline_mode<synchronous>, transform_indices = @transform_12, window_bounds = array<i64: 128, 256>}, {pipeline_mode = #tpu.pipeline_mode<synchronous>, transform_indices = @transform_13, window_bounds = array<i64: 1, 256>}, {transform_indices = @transform_14, window_bounds = array<i64: 8, 256>}, {transform_indices = @transform_15, window_bounds = array<i64: 8, 256>}]} {
    %c0 = arith.constant 0 : index
    %c0_0 = arith.constant 0 : index
    %0 = vector.load %arg1[%c0, %c0_0] : memref<8x256xf32, #tpu.memory_space<vmem>>, vector<8x256xf32>
    %c0_1 = arith.constant 0 : index
    %c0_2 = arith.constant 0 : index
    %1 = vector.load %arg2[%c0_1, %c0_2] : memref<256x128xf32, #tpu.memory_space<vmem>>, vector<256x128xf32>
    %cst = arith.constant dense<0.000000e+00> : vector<8x128xf32>
    %2 = tpu.matmul %0, %1, %cst {dimension_numbers = #tpu.dot_dimension_numbers<[1], [0], [0], [1], [0, 0, 1, 1], [], []>} : vector<8x256xf32>, vector<256x128xf32>, vector<8x128xf32> -> vector<8x128xf32>
    %c0_3 = arith.constant 0 : index
    %c0_4 = arith.constant 0 : index
    %3 = vector.load %arg3[%c0_3, %c0_4] : memref<1x128xf32, #tpu.memory_space<vmem>>, vector<1x128xf32>
    %4 = vector.broadcast %3 : vector<1x128xf32> to vector<8x128xf32>
    %5 = arith.addf %2, %4 : vector<8x128xf32>
    %cst_5 = arith.constant 0.000000e+00 : f32
    %6 = vector.broadcast %cst_5 : f32 to vector<8x128xf32>
    %7 = arith.maximumf %5, %6 : vector<8x128xf32>
    %c0_6 = arith.constant 0 : index
    %c0_7 = arith.constant 0 : index
    %8 = vector.load %arg4[%c0_6, %c0_7] : memref<128x128xf32, #tpu.memory_space<vmem>>, vector<128x128xf32>
    %cst_8 = arith.constant dense<0.000000e+00> : vector<8x128xf32>
    %9 = tpu.matmul %7, %8, %cst_8 {dimension_numbers = #tpu.dot_dimension_numbers<[1], [0], [0], [1], [0, 0, 1, 1], [], []>} : vector<8x128xf32>, vector<128x128xf32>, vector<8x128xf32> -> vector<8x128xf32>
    %c0_9 = arith.constant 0 : index
    %c0_10 = arith.constant 0 : index
    %10 = vector.load %arg5[%c0_9, %c0_10] : memref<1x128xf32, #tpu.memory_space<vmem>>, vector<1x128xf32>
    %11 = vector.broadcast %10 : vector<1x128xf32> to vector<8x128xf32>
    %12 = arith.addf %9, %11 : vector<8x128xf32>
    %cst_11 = arith.constant 0.000000e+00 : f32
    %13 = vector.broadcast %cst_11 : f32 to vector<8x128xf32>
    %14 = arith.maximumf %12, %13 : vector<8x128xf32>
    %c0_12 = arith.constant 0 : index
    %c0_13 = arith.constant 0 : index
    %15 = vector.load %arg6[%c0_12, %c0_13] : memref<128x256xf32, #tpu.memory_space<vmem>>, vector<128x256xf32>
    %cst_14 = arith.constant dense<0.000000e+00> : vector<8x256xf32>
    %16 = tpu.matmul %14, %15, %cst_14 {dimension_numbers = #tpu.dot_dimension_numbers<[1], [0], [0], [1], [0, 0, 1, 1], [], []>} : vector<8x128xf32>, vector<128x256xf32>, vector<8x256xf32> -> vector<8x256xf32>
    %c0_15 = arith.constant 0 : index
    %c0_16 = arith.constant 0 : index
    %17 = vector.load %arg7[%c0_15, %c0_16] : memref<1x256xf32, #tpu.memory_space<vmem>>, vector<1x256xf32>
    %18 = vector.broadcast %17 : vector<1x256xf32> to vector<8x256xf32>
    %19 = arith.addf %16, %18 : vector<8x256xf32>
    %20 = vector.extract_strided_slice %19 {offsets = [0, 0], sizes = [8, 128], strides = [1, 1]} : vector<8x256xf32> to vector<8x128xf32>
    %21 = vector.extract_strided_slice %19 {offsets = [0, 128], sizes = [8, 128], strides = [1, 1]} : vector<8x256xf32> to vector<8x128xf32>
    %cst_17 = arith.constant 5.000000e-01 : f32
    %22 = vector.broadcast %cst_17 : f32 to vector<8x128xf32>
    %23 = arith.mulf %22, %21 : vector<8x128xf32>
    %24 = math.exp %23 : vector<8x128xf32>
    %c0_18 = arith.constant 0 : index
    %c0_19 = arith.constant 0 : index
    %25 = vector.load %arg8[%c0_18, %c0_19] : memref<8x128xf32, #tpu.memory_space<vmem>>, vector<8x128xf32>
    %26 = arith.mulf %25, %24 : vector<8x128xf32>
    %27 = arith.addf %20, %26 : vector<8x128xf32>
    %c0_20 = arith.constant 0 : index
    %c0_21 = arith.constant 0 : index
    %28 = vector.load %arg9[%c0_20, %c0_21] : memref<128x128xf32, #tpu.memory_space<vmem>>, vector<128x128xf32>
    %cst_22 = arith.constant dense<0.000000e+00> : vector<8x128xf32>
    %29 = tpu.matmul %27, %28, %cst_22 {dimension_numbers = #tpu.dot_dimension_numbers<[1], [0], [0], [1], [0, 0, 1, 1], [], []>} : vector<8x128xf32>, vector<128x128xf32>, vector<8x128xf32> -> vector<8x128xf32>
    %c0_23 = arith.constant 0 : index
    %c0_24 = arith.constant 0 : index
    %30 = vector.load %arg10[%c0_23, %c0_24] : memref<1x128xf32, #tpu.memory_space<vmem>>, vector<1x128xf32>
    %31 = vector.broadcast %30 : vector<1x128xf32> to vector<8x128xf32>
    %32 = arith.addf %29, %31 : vector<8x128xf32>
    %cst_25 = arith.constant 0.000000e+00 : f32
    %33 = vector.broadcast %cst_25 : f32 to vector<8x128xf32>
    %34 = arith.maximumf %32, %33 : vector<8x128xf32>
    %c0_26 = arith.constant 0 : index
    %c0_27 = arith.constant 0 : index
    %35 = vector.load %arg11[%c0_26, %c0_27] : memref<128x128xf32, #tpu.memory_space<vmem>>, vector<128x128xf32>
    %cst_28 = arith.constant dense<0.000000e+00> : vector<8x128xf32>
    %36 = tpu.matmul %34, %35, %cst_28 {dimension_numbers = #tpu.dot_dimension_numbers<[1], [0], [0], [1], [0, 0, 1, 1], [], []>} : vector<8x128xf32>, vector<128x128xf32>, vector<8x128xf32> -> vector<8x128xf32>
    %c0_29 = arith.constant 0 : index
    %c0_30 = arith.constant 0 : index
    %37 = vector.load %arg12[%c0_29, %c0_30] : memref<1x128xf32, #tpu.memory_space<vmem>>, vector<1x128xf32>
    %38 = vector.broadcast %37 : vector<1x128xf32> to vector<8x128xf32>
    %39 = arith.addf %36, %38 : vector<8x128xf32>
    %cst_31 = arith.constant 0.000000e+00 : f32
    %40 = vector.broadcast %cst_31 : f32 to vector<8x128xf32>
    %41 = arith.maximumf %39, %40 : vector<8x128xf32>
    %c0_32 = arith.constant 0 : index
    %c0_33 = arith.constant 0 : index
    %42 = vector.load %arg13[%c0_32, %c0_33] : memref<128x256xf32, #tpu.memory_space<vmem>>, vector<128x256xf32>
    %cst_34 = arith.constant dense<0.000000e+00> : vector<8x256xf32>
    %43 = tpu.matmul %41, %42, %cst_34 {dimension_numbers = #tpu.dot_dimension_numbers<[1], [0], [0], [1], [0, 0, 1, 1], [], []>} : vector<8x128xf32>, vector<128x256xf32>, vector<8x256xf32> -> vector<8x256xf32>
    %c0_35 = arith.constant 0 : index
    %c0_36 = arith.constant 0 : index
    %44 = vector.load %arg14[%c0_35, %c0_36] : memref<1x256xf32, #tpu.memory_space<vmem>>, vector<1x256xf32>
    %45 = vector.broadcast %44 : vector<1x256xf32> to vector<8x256xf32>
    %46 = arith.addf %43, %45 : vector<8x256xf32>
    %47 = arith.negf %46 : vector<8x256xf32>
    %48 = math.exp %47 : vector<8x256xf32>
    %cst_37 = arith.constant 1.000000e+00 : f32
    %49 = vector.broadcast %cst_37 : f32 to vector<8x256xf32>
    %50 = arith.addf %49, %48 : vector<8x256xf32>
    %51 = arith.divf %49, %50 : vector<8x256xf32>
    %c0_38 = arith.constant 0 : index
    %c0_39 = arith.constant 0 : index
    %52 = vector.load %arg15[%c0_38, %c0_39] : memref<8x256xf32, #tpu.memory_space<vmem>>, vector<8x256xf32>
    tpu.vector_store %arg15[%c0_38, %c0_39], %51 {strides = array<i32>} : memref<8x256xf32, #tpu.memory_space<vmem>>, vector<8x256xf32>,
    %c0_40 = arith.constant 0 : index
    %c0_41 = arith.constant 0 : index
    %53 = vector.load %arg16[%c0_40, %c0_41] : memref<8x256xf32, #tpu.memory_space<vmem>>, vector<8x256xf32>
    tpu.vector_store %arg16[%c0_40, %c0_41], %19 {strides = array<i32>} : memref<8x256xf32, #tpu.memory_space<vmem>>, vector<8x256xf32>,
    return
  }
  func.func @transform_0(%arg0: i32) -> (i32, i32) {
    %c0_i32 = arith.constant 0 : i32
    %c0_i32_0 = arith.constant 0 : i32
    return %arg0, %c0_i32 : i32, i32
  }
  func.func @transform_1(%arg0: i32) -> (i32, i32) {
    %c0_i32 = arith.constant 0 : i32
    %c0_i32_0 = arith.constant 0 : i32
    %c0_i32_1 = arith.constant 0 : i32
    return %c0_i32, %c0_i32_0 : i32, i32
  }
  func.func @transform_2(%arg0: i32) -> (i32, i32) {
    %c0_i32 = arith.constant 0 : i32
    %c0_i32_0 = arith.constant 0 : i32
    %c0_i32_1 = arith.constant 0 : i32
    return %c0_i32, %c0_i32_0 : i32, i32
  }
  func.func @transform_3(%arg0: i32) -> (i32, i32) {
    %c0_i32 = arith.constant 0 : i32
    %c0_i32_0 = arith.constant 0 : i32
    %c0_i32_1 = arith.constant 0 : i32
    return %c0_i32, %c0_i32_0 : i32, i32
  }
  func.func @transform_4(%arg0: i32) -> (i32, i32) {
    %c0_i32 = arith.constant 0 : i32
    %c0_i32_0 = arith.constant 0 : i32
    %c0_i32_1 = arith.constant 0 : i32
    return %c0_i32, %c0_i32_0 : i32, i32
  }
  func.func @transform_5(%arg0: i32) -> (i32, i32) {
    %c0_i32 = arith.constant 0 : i32
    %c0_i32_0 = arith.constant 0 : i32
    %c0_i32_1 = arith.constant 0 : i32
    return %c0_i32, %c0_i32_0 : i32, i32
  }
  func.func @transform_6(%arg0: i32) -> (i32, i32) {
    %c0_i32 = arith.constant 0 : i32
    %c0_i32_0 = arith.constant 0 : i32
    %c0_i32_1 = arith.constant 0 : i32
    return %c0_i32, %c0_i32_0 : i32, i32
  }
  func.func @transform_7(%arg0: i32) -> (i32, i32) {
    %c0_i32 = arith.constant 0 : i32
    %c0_i32_0 = arith.constant 0 : i32
    return %arg0, %c0_i32 : i32, i32
  }
  func.func @transform_8(%arg0: i32) -> (i32, i32) {
    %c0_i32 = arith.constant 0 : i32
    %c0_i32_0 = arith.constant 0 : i32
    %c0_i32_1 = arith.constant 0 : i32
    return %c0_i32, %c0_i32_0 : i32, i32
  }
  func.func @transform_9(%arg0: i32) -> (i32, i32) {
    %c0_i32 = arith.constant 0 : i32
    %c0_i32_0 = arith.constant 0 : i32
    %c0_i32_1 = arith.constant 0 : i32
    return %c0_i32, %c0_i32_0 : i32, i32
  }
  func.func @transform_10(%arg0: i32) -> (i32, i32) {
    %c0_i32 = arith.constant 0 : i32
    %c0_i32_0 = arith.constant 0 : i32
    %c0_i32_1 = arith.constant 0 : i32
    return %c0_i32, %c0_i32_0 : i32, i32
  }
  func.func @transform_11(%arg0: i32) -> (i32, i32) {
    %c0_i32 = arith.constant 0 : i32
    %c0_i32_0 = arith.constant 0 : i32
    %c0_i32_1 = arith.constant 0 : i32
    return %c0_i32, %c0_i32_0 : i32, i32
  }
  func.func @transform_12(%arg0: i32) -> (i32, i32) {
    %c0_i32 = arith.constant 0 : i32
    %c0_i32_0 = arith.constant 0 : i32
    %c0_i32_1 = arith.constant 0 : i32
    return %c0_i32, %c0_i32_0 : i32, i32
  }
  func.func @transform_13(%arg0: i32) -> (i32, i32) {
    %c0_i32 = arith.constant 0 : i32
    %c0_i32_0 = arith.constant 0 : i32
    %c0_i32_1 = arith.constant 0 : i32
    return %c0_i32, %c0_i32_0 : i32, i32
  }
  func.func @transform_14(%arg0: i32) -> (i32, i32) {
    %c0_i32 = arith.constant 0 : i32
    %c0_i32_0 = arith.constant 0 : i32
    return %arg0, %c0_i32 : i32, i32
  }
  func.func @transform_15(%arg0: i32) -> (i32, i32) {
    %c0_i32 = arith.constant 0 : i32
    %c0_i32_0 = arith.constant 0 : i32
    return %arg0, %c0_i32 : i32, i32
  }
}

</mosaic_0001>

<llo_original>
// kernel: tpu_custom_call.1
$region0: #{tpu_custom_call.1}
  #allocation0 [shape = 'u32[]', space=smem, size = 0x4, offset = 0x4, fixed_abs, tag = 'smem constant byte address 0x4 - core index']
  #allocation1 [shape = 'u32[144,128]{1,0:T(1,128)}', space=vmem, size = 0x12000, scoped, tag = 'internal scratch']
  %s0 = inlined_call_operand.hbm [shape: f32[8,256], index: 0, kind: input, shape index: {}]
  %s1 = inlined_call_operand.hbm [shape: f32[256,128], index: 1, kind: input, shape index: {}]
  %s2 = inlined_call_operand.vmem [shape: f32[1,128], index: 2, kind: input, shape index: {}]
  %s3 = inlined_call_operand.hbm [shape: f32[128,128], index: 3, kind: input, shape index: {}]
  %s4 = inlined_call_operand.vmem [shape: f32[1,128], index: 4, kind: input, shape index: {}]
  %s5 = inlined_call_operand.hbm [shape: f32[128,256], index: 5, kind: input, shape index: {}]
  %s6 = inlined_call_operand.vmem [shape: f32[1,256], index: 6, kind: input, shape index: {}]
  %s7 = inlined_call_operand.vmem [shape: f32[8,128], index: 7, kind: input, shape index: {}]
  %s8 = inlined_call_operand.hbm [shape: f32[128,128], index: 8, kind: input, shape index: {}]
  %s9 = inlined_call_operand.vmem [shape: f32[1,128], index: 9, kind: input, shape index: {}]
  %s10 = inlined_call_operand.hbm [shape: f32[128,128], index: 10, kind: input, shape index: {}]
  %s11 = inlined_call_operand.vmem [shape: f32[1,128], index: 11, kind: input, shape index: {}]
  %s12 = inlined_call_operand.hbm [shape: f32[128,256], index: 12, kind: input, shape index: {}]
  %s13 = inlined_call_operand.vmem [shape: f32[1,256], index: 13, kind: input, shape index: {}]
  %s14 = inlined_call_operand.hbm [shape: f32[8,256], index: 14, kind: output, shape index: {0}]
  %s15 = inlined_call_operand.hbm [shape: f32[8,256], index: 15, kind: output, shape index: {1}]
  %16 = xla_tuple %s14, %s15
  %s17 = sld [smem:[#allocation0]]
  $region102: #{tpu_custom_call.1} parent=0
    _
  %s19 = ssub.s32 1, %s17
  %s20 = scalar_select 0, %s19, %s17
  $region1: #{tpu_custom_call.1} parent=0
    #allocation2 [shape = 'u8[8192]{0}', space=vmem, size = 0x2000, scoped, tag = 'input window, operand 0, single buffered']
    #allocation3 [shape = 's32[1]{0}', space=sflag, size = 0x4, scoped, tag = 'scoped memory for tpu_custom_call.1']
    #allocation4 [shape = 's32[1]{0}', space=sflag, size = 0x4, scoped, tag = 'scoped memory for tpu_custom_call.1']
    #allocation5 [shape = 'u8[131072]{0}', space=vmem, size = 0x20000, scoped, tag = 'input window, operand 1, single buffered']
    #allocation6 [shape = 's32[1]{0}', space=sflag, size = 0x4, scoped, tag = 'scoped memory for tpu_custom_call.1']
    #allocation7 [shape = 'u8[65536]{0}', space=vmem, size = 0x10000, scoped, tag = 'input window, operand 3, single buffered']
    #allocation8 [shape = 'u8[131072]{0}', space=vmem, size = 0x20000, scoped, tag = 'input window, operand 5, single buffered']
    #allocation9 [shape = 's32[1]{0}', space=sflag, size = 0x4, scoped, tag = 'scoped memory for tpu_custom_call.1']
    #allocation10 [shape = 'u8[65536]{0}', space=vmem, size = 0x10000, scoped, tag = 'input window, operand 8, single buffered']
    #allocation11 [shape = 'u8[65536]{0}', space=vmem, size = 0x10000, scoped, tag = 'input window, operand 10, single buffered']
    #allocation12 [shape = 's32[1]{0}', space=sflag, size = 0x4, scoped, tag = 'scoped memory for tpu_custom_call.1']
    #allocation13 [shape = 'u8[131072]{0}', space=vmem, size = 0x20000, scoped, tag = 'input window, operand 12, single buffered']
    #allocation14 [shape = 'u8[8192]{0}', space=vmem, size = 0x2000, scoped, tag = 'output window, operand 0, single buffered']
    #allocation15 [shape = 'u8[8192]{0}', space=vmem, size = 0x2000, scoped, tag = 'output window, operand 1, single buffered']
    #allocation16 [shape = 's32[1]{0}', space=sflag, size = 0x4, scoped, tag = 'scoped memory for tpu_custom_call.1']
    %21 = vsyncpa [#allocation3], 0
    %22 = vsyncpa [#allocation6], 0
    %23 = vsyncpa [#allocation9], 0
    %24 = vsyncpa [#allocation12], 0
    %25 = vsyncpa [#allocation4], 0
    %26 = vsyncpa [#allocation16], 0
    // Predicated region
    $region2: #{tpu_custom_call.1} parent=1 // pred_check
      _
    $region3: #{tpu_custom_call.1} parent=1 // pred_check_branch
      %28 = sbr.rel (0) target = $region5
    $region4: #{tpu_custom_call.1} parent=1 // pred_region
      %s30 = ssub.s32 256, 256
      %31 = vsyncadd [#allocation3], %s30
      %s33 = sshll.u32 [#allocation2], 4
      %s34 = int_to_ptr.vmem [resolvable:$true] %s33
      %36 = dma.hbm_to_vmem [thread:$0]  %s0, 256, %s34, [#allocation3]
    $region5: #{tpu_custom_call.1} parent=1 // pred_fallthru
      _
    // Predicated region
    $region6: #{tpu_custom_call.1} parent=1 // pred_check
      _
    $region7: #{tpu_custom_call.1} parent=1 // pred_check_branch
      %38 = sbr.rel (0) target = $region9
    $region8: #{tpu_custom_call.1} parent=1 // pred_region
      %s40 = ssub.s32 4096, 4096
      %41 = vsyncadd [#allocation6], %s40
      %s42 = sshll.u32 [#allocation5], 4
      %s43 = int_to_ptr.vmem [resolvable:$true] %s42
      %48 = dma.hbm_to_vmem [thread:$0]  %s1, 4096, %s43, [#allocation6], 128, 128, 8
    $region9: #{tpu_custom_call.1} parent=1 // pred_fallthru
      _
    // Predicated region
    $region10: #{tpu_custom_call.1} parent=1 // pred_check
      _
    $region11: #{tpu_custom_call.1} parent=1 // pred_check_branch
      %50 = sbr.rel (0) target = $region13
    $region12: #{tpu_custom_call.1} parent=1 // pred_region
      _
    $region13: #{tpu_custom_call.1} parent=1 // pred_fallthru
      _
    // Predicated region
    $region14: #{tpu_custom_call.1} parent=1 // pred_check
      _
    $region15: #{tpu_custom_call.1} parent=1 // pred_check_branch
      %52 = sbr.rel (0) target = $region17
    $region16: #{tpu_custom_call.1} parent=1 // pred_region
      %s54 = ssub.s32 2048, 2048
      %55 = vsyncadd [#allocation6], %s54
      %s56 = sshll.u32 [#allocation7], 4
      %s57 = int_to_ptr.vmem [resolvable:$true] %s56
      %62 = dma.hbm_to_vmem [thread:$0]  %s3, 2048, %s57, [#allocation6], 128, 128, 8
    $region17: #{tpu_custom_call.1} parent=1 // pred_fallthru
      _
    // Predicated region
    $region18: #{tpu_custom_call.1} parent=1 // pred_check
      _
    $region19: #{tpu_custom_call.1} parent=1 // pred_check_branch
      %64 = sbr.rel (0) target = $region21
    $region20: #{tpu_custom_call.1} parent=1 // pred_region
      _
    $region21: #{tpu_custom_call.1} parent=1 // pred_fallthru
      _
    // Predicated region
    $region22: #{tpu_custom_call.1} parent=1 // pred_check
      _
    $region23: #{tpu_custom_call.1} parent=1 // pred_check_branch
      %66 = sbr.rel (0) target = $region25
    $region24: #{tpu_custom_call.1} parent=1 // pred_region
      %s68 = ssub.s32 4096, 4096
      %69 = vsyncadd [#allocation9], %s68
      %s70 = sshll.u32 [#allocation8], 4
      %s71 = int_to_ptr.vmem [resolvable:$true] %s70
      %76 = dma.hbm_to_vmem [thread:$0]  %s5, 4096, %s71, [#allocation9], 256, 256, 16
    $region25: #{tpu_custom_call.1} parent=1 // pred_fallthru
      _
    // Predicated region
    $region26: #{tpu_custom_call.1} parent=1 // pred_check
      _
    $region27: #{tpu_custom_call.1} parent=1 // pred_check_branch
      %78 = sbr.rel (0) target = $region29
    $region28: #{tpu_custom_call.1} parent=1 // pred_region
      _
    $region29: #{tpu_custom_call.1} parent=1 // pred_fallthru
      _
    // Predicated region
    $region30: #{tpu_custom_call.1} parent=1 // pred_check
      _
    $region31: #{tpu_custom_call.1} parent=1 // pred_check_branch
      %80 = sbr.rel (0) target = $region33
    $region32: #{tpu_custom_call.1} parent=1 // pred_region
      _
    $region33: #{tpu_custom_call.1} parent=1 // pred_fallthru
      _
    // Predicated region
    $region34: #{tpu_custom_call.1} parent=1 // pred_check
      _
    $region35: #{tpu_custom_call.1} parent=1 // pred_check_branch
      %82 = sbr.rel (0) target = $region37
    $region36: #{tpu_custom_call.1} parent=1 // pred_region
      %s84 = ssub.s32 2048, 2048
      %85 = vsyncadd [#allocation9], %s84
      %s86 = sshll.u32 [#allocation10], 4
      %s87 = int_to_ptr.vmem [resolvable:$true] %s86
      %92 = dma.hbm_to_vmem [thread:$0]  %s8, 2048, %s87, [#allocation9], 128, 128, 8
    $region37: #{tpu_custom_call.1} parent=1 // pred_fallthru
      _
    // Predicated region
    $region38: #{tpu_custom_call.1} parent=1 // pred_check
      _
    $region39: #{tpu_custom_call.1} parent=1 // pred_check_branch
      %94 = sbr.rel (0) target = $region41
    $region40: #{tpu_custom_call.1} parent=1 // pred_region
      _
    $region41: #{tpu_custom_call.1} parent=1 // pred_fallthru
      _
    // Predicated region
    $region42: #{tpu_custom_call.1} parent=1 // pred_check
      _
    $region43: #{tpu_custom_call.1} parent=1 // pred_check_branch
      %96 = sbr.rel (0) target = $region45
    $region44: #{tpu_custom_call.1} parent=1 // pred_region
      %s98 = ssub.s32 2048, 2048
      %99 = vsyncadd [#allocation12], %s98
      %s100 = sshll.u32 [#allocation11], 4
      %s101 = int_to_ptr.vmem [resolvable:$true] %s100
      %106 = dma.hbm_to_vmem [thread:$0]  %s10, 2048, %s101, [#allocation12], 128, 128, 8
    $region45: #{tpu_custom_call.1} parent=1 // pred_fallthru
      _
    // Predicated region
    $region46: #{tpu_custom_call.1} parent=1 // pred_check
      _
    $region47: #{tpu_custom_call.1} parent=1 // pred_check_branch
      %108 = sbr.rel (0) target = $region49
    $region48: #{tpu_custom_call.1} parent=1 // pred_region
      _
    $region49: #{tpu_custom_call.1} parent=1 // pred_fallthru
      _
    // Predicated region
    $region50: #{tpu_custom_call.1} parent=1 // pred_check
      _
    $region51: #{tpu_custom_call.1} parent=1 // pred_check_branch
      %110 = sbr.rel (0) target = $region53
    $region52: #{tpu_custom_call.1} parent=1 // pred_region
      %s112 = ssub.s32 4096, 4096
      %113 = vsyncadd [#allocation12], %s112
      %s114 = sshll.u32 [#allocation13], 4
      %s115 = int_to_ptr.vmem [resolvable:$true] %s114
      %120 = dma.hbm_to_vmem [thread:$0]  %s12, 4096, %s115, [#allocation12], 256, 256, 16
    $region53: #{tpu_custom_call.1} parent=1 // pred_fallthru
      _
    // Predicated region
    $region54: #{tpu_custom_call.1} parent=1 // pred_check
      _
    $region55: #{tpu_custom_call.1} parent=1 // pred_check_branch
      %122 = sbr.rel (0) target = $region57
    $region56: #{tpu_custom_call.1} parent=1 // pred_region
      _
    $region57: #{tpu_custom_call.1} parent=1 // pred_fallthru
      _
    // Predicated region
    $region58: #{tpu_custom_call.1} parent=1 // pred_check
      _
    $region59: #{tpu_custom_call.1} parent=1 // pred_check_branch
      %124 = sbr.rel (0) target = $region61
    $region60: #{tpu_custom_call.1} parent=1 // pred_region
      %125 = dma.done [#allocation3], 256
    $region61: #{tpu_custom_call.1} parent=1 // pred_fallthru
      _
    // Predicated region
    $region62: #{tpu_custom_call.1} parent=1 // pred_check
      _
    $region63: #{tpu_custom_call.1} parent=1 // pred_check_branch
      %127 = sbr.rel (0) target = $region65
    $region64: #{tpu_custom_call.1} parent=1 // pred_region
      %128 = dma.done [#allocation6], 4096
    $region65: #{tpu_custom_call.1} parent=1 // pred_fallthru
      _
    // Predicated region
    $region66: #{tpu_custom_call.1} parent=1 // pred_check
      _
    $region67: #{tpu_custom_call.1} parent=1 // pred_check_branch
      %130 = sbr.rel (0) target = $region69
    $region68: #{tpu_custom_call.1} parent=1 // pred_region
      %131 = dma.done [#allocation6], 2048
    $region69: #{tpu_custom_call.1} parent=1 // pred_fallthru
      _
    // Predicated region
    $region70: #{tpu_custom_call.1} parent=1 // pred_check
      _
    $region71: #{tpu_custom_call.1} parent=1 // pred_check_branch
      %133 = sbr.rel (0) target = $region73
    $region72: #{tpu_custom_call.1} parent=1 // pred_region
      %134 = dma.done [#allocation9], 4096
    $region73: #{tpu_custom_call.1} parent=1 // pred_fallthru
      _
    // Predicated region
    $region74: #{tpu_custom_call.1} parent=1 // pred_check
      _
    $region75: #{tpu_custom_call.1} parent=1 // pred_check_branch
      %136 = sbr.rel (0) target = $region77
    $region76: #{tpu_custom_call.1} parent=1 // pred_region
      %137 = dma.done [#allocation9], 2048
    $region77: #{tpu_custom_call.1} parent=1 // pred_fallthru
      _
    // Predicated region
    $region78: #{tpu_custom_call.1} parent=1 // pred_check
      _
    $region79: #{tpu_custom_call.1} parent=1 // pred_check_branch
      %139 = sbr.rel (0) target = $region81
    $region80: #{tpu_custom_call.1} parent=1 // pred_region
      %140 = dma.done [#allocation12], 2048
    $region81: #{tpu_custom_call.1} parent=1 // pred_fallthru
      _
    // Predicated region
    $region82: #{tpu_custom_call.1} parent=1 // pred_check
      _
    $region83: #{tpu_custom_call.1} parent=1 // pred_check_branch
      %142 = sbr.rel (0) target = $region85
    $region84: #{tpu_custom_call.1} parent=1 // pred_region
      %143 = dma.done [#allocation12], 4096
    $region85: #{tpu_custom_call.1} parent=1 // pred_fallthru
      _
    %v144 = vld [vmem:[#allocation2] sm:$0xff]
    %v145 = vld [vmem:[#allocation2 + $0x8] sm:$0xff]
    %v146 = vld [vmem:[#allocation5] sm:$0xff]
    %v147 = vld [vmem:[#allocation5 + $0x8] sm:$0xff]
    %v148 = vld [vmem:[#allocation5 + $0x10] sm:$0xff]
    %v149 = vld [vmem:[#allocation5 + $0x18] sm:$0xff]
    %v150 = vld [vmem:[#allocation5 + $0x20] sm:$0xff]
    %v151 = vld [vmem:[#allocation5 + $0x28] sm:$0xff]
    %v152 = vld [vmem:[#allocation5 + $0x30] sm:$0xff]
    %v153 = vld [vmem:[#allocation5 + $0x38] sm:$0xff]
    %v154 = vld [vmem:[#allocation5 + $0x40] sm:$0xff]
    %v155 = vld [vmem:[#allocation5 + $0x48] sm:$0xff]
    %v156 = vld [vmem:[#allocation5 + $0x50] sm:$0xff]
    %v157 = vld [vmem:[#allocation5 + $0x58] sm:$0xff]
    %v158 = vld [vmem:[#allocation5 + $0x60] sm:$0xff]
    %v159 = vld [vmem:[#allocation5 + $0x68] sm:$0xff]
    %v160 = vld [vmem:[#allocation5 + $0x70] sm:$0xff]
    %v161 = vld [vmem:[#allocation5 + $0x78] sm:$0xff]
    %v162 = vld [vmem:[#allocation5 + $0x80] sm:$0xff]
    %v163 = vld [vmem:[#allocation5 + $0x88] sm:$0xff]
    %v164 = vld [vmem:[#allocation5 + $0x90] sm:$0xff]
    %v165 = vld [vmem:[#allocation5 + $0x98] sm:$0xff]
    %v166 = vld [vmem:[#allocation5 + $0xa0] sm:$0xff]
    %v167 = vld [vmem:[#allocation5 + $0xa8] sm:$0xff]
    %v168 = vld [vmem:[#allocation5 + $0xb0] sm:$0xff]
    %v169 = vld [vmem:[#allocation5 + $0xb8] sm:$0xff]
    %v170 = vld [vmem:[#allocation5 + $0xc0] sm:$0xff]
    %v171 = vld [vmem:[#allocation5 + $0xc8] sm:$0xff]
    %v172 = vld [vmem:[#allocation5 + $0xd0] sm:$0xff]
    %v173 = vld [vmem:[#allocation5 + $0xd8] sm:$0xff]
    %v174 = vld [vmem:[#allocation5 + $0xe0] sm:$0xff]
    %v175 = vld [vmem:[#allocation5 + $0xe8] sm:$0xff]
    %v176 = vld [vmem:[#allocation5 + $0xf0] sm:$0xff]
    %v177 = vld [vmem:[#allocation5 + $0xf8] sm:$0xff]
    %v178 = vld [vmem:[%s2] sm:$0x1]
    %v180 = vlaneseq
    %v181 = vshrl.u32 %v180, 7
    %v182 = vsub.s32 0, %v181
    %v183 = vrot.slane %v178, %v182
    %185 = vmatprep.subr.mxu0 0.0
    %186 = vmatpush1.msra.mxu0 %v146
    %187 = vmatprep.subr.mxu0 0.0
    %188 = vmatpush1.msra.mxu0 %v147
    %189 = vmatprep.subr.mxu0 0.0
    %190 = vmatpush1.msra.mxu0 %v148
    %191 = vmatprep.subr.mxu0 0.0
    %192 = vmatpush1.msra.mxu0 %v149
    %193 = vmatprep.subr.mxu0 0.0
    %194 = vmatpush1.msra.mxu0 %v150
    %195 = vmatprep.subr.mxu0 0.0
    %196 = vmatpush1.msra.mxu0 %v151
    %197 = vmatprep.subr.mxu0 0.0
    %198 = vmatpush1.msra.mxu0 %v152
    %199 = vmatprep.subr.mxu0 0.0
    %200 = vmatpush1.msra.mxu0 %v153
    %201 = vmatprep.subr.mxu0 0.0
    %202 = vmatpush1.msra.mxu0 %v154
    %203 = vmatprep.subr.mxu0 0.0
    %204 = vmatpush1.msra.mxu0 %v155
    %205 = vmatprep.subr.mxu0 0.0
    %206 = vmatpush1.msra.mxu0 %v156
    %207 = vmatprep.subr.mxu0 0.0
    %208 = vmatpush1.msra.mxu0 %v157
    %209 = vmatprep.subr.mxu0 0.0
    %210 = vmatpush1.msra.mxu0 %v158
    %211 = vmatprep.subr.mxu0 0.0
    %212 = vmatpush1.msra.mxu0 %v159
    %213 = vmatprep.subr.mxu0 0.0
    %214 = vmatpush1.msra.mxu0 %v160
    %215 = vmatprep.subr.mxu0 0.0
    %216 = vmatpush1.msra.mxu0 %v161
    %217 = vmatprep.subr.mxu0 0.0
    %218 = vmatpush1.msra.mxu0 %v162
    %219 = vmatprep.subr.mxu0 0.0
    %220 = vmatpush1.msra.mxu0 %v163
    %221 = vmatprep.subr.mxu0 0.0
    %222 = vmatpush1.msra.mxu0 %v164
    %223 = vmatprep.subr.mxu0 0.0
    %224 = vmatpush1.msra.mxu0 %v165
    %225 = vmatprep.subr.mxu0 0.0
    %226 = vmatpush1.msra.mxu0 %v166
    %227 = vmatprep.subr.mxu0 0.0
    %228 = vmatpush1.msra.mxu0 %v167
    %229 = vmatprep.subr.mxu0 0.0
    %230 = vmatpush1.msra.mxu0 %v168
    %231 = vmatprep.subr.mxu0 0.0
    %232 = vmatpush1.msra.mxu0 %v169
    %233 = vmatprep.subr.mxu0 0.0
    %234 = vmatpush1.msra.mxu0 %v170
    %235 = vmatprep.subr.mxu0 0.0
    %236 = vmatpush1.msra.mxu0 %v171
    %237 = vmatprep.subr.mxu0 0.0
    %238 = vmatpush1.msra.mxu0 %v172
    %239 = vmatprep.subr.mxu0 0.0
    %240 = vmatpush1.msra.mxu0 %v173
    %241 = vmatprep.subr.mxu0 0.0
    %242 = vmatpush1.msra.mxu0 %v174
    %243 = vmatprep.subr.mxu0 0.0
    %244 = vmatpush1.msra.mxu0 %v175
    %245 = vmatprep.subr.mxu0 0.0
    %246 = vmatpush1.msra.mxu0 %v176
    %247 = vmatprep.subr.mxu0 0.0
    %248 = vmatpush1.msra.mxu0 %v177
    %249 = vmatprep.mubr.f32.mxu0 %v145
    %250 = vmatmul.mubr.f32.gmra.mrb[0].mxu0 %v144
    %v251 = vpop.f32.mrb[0].mxu0
    %v252 = vadd.f32 %v183, %v251
    %v253 = vpop.f32.mrb[0].mxu0
    %254 = vdwg.mxu0
    %v255 = vmax.f32 %v252, 0.0
    %v256 = vld [vmem:[#allocation7] sm:$0xff]
    %v257 = vld [vmem:[#allocation7 + $0x8] sm:$0xff]
    %v258 = vld [vmem:[#allocation7 + $0x10] sm:$0xff]
    %v259 = vld [vmem:[#allocation7 + $0x18] sm:$0xff]
    %v260 = vld [vmem:[#allocation7 + $0x20] sm:$0xff]
    %v261 = vld [vmem:[#allocation7 + $0x28] sm:$0xff]
    %v262 = vld [vmem:[#allocation7 + $0x30] sm:$0xff]
    %v263 = vld [vmem:[#allocation7 + $0x38] sm:$0xff]
    %v264 = vld [vmem:[#allocation7 + $0x40] sm:$0xff]
    %v265 = vld [vmem:[#allocation7 + $0x48] sm:$0xff]
    %v266 = vld [vmem:[#allocation7 + $0x50] sm:$0xff]
    %v267 = vld [vmem:[#allocation7 + $0x58] sm:$0xff]
    %v268 = vld [vmem:[#allocation7 + $0x60] sm:$0xff]
    %v269 = vld [vmem:[#allocation7 + $0x68] sm:$0xff]
    %v270 = vld [vmem:[#allocation7 + $0x70] sm:$0xff]
    %v271 = vld [vmem:[#allocation7 + $0x78] sm:$0xff]
    %v272 = vld [vmem:[%s4] sm:$0x1]
    %v274 = vlaneseq
    %v275 = vshrl.u32 %v274, 7
    %v276 = vsub.s32 0, %v275
    %v277 = vrot.slane %v272, %v276
    %279 = vmatprep.subr.mxu0 0.0
    %280 = vmatpush1.msra.mxu0 %v256
    %281 = vmatprep.subr.mxu0 0.0
    %282 = vmatpush1.msra.mxu0 %v257
    %283 = vmatprep.subr.mxu0 0.0
    %284 = vmatpush1.msra.mxu0 %v258
    %285 = vmatprep.subr.mxu0 0.0
    %286 = vmatpush1.msra.mxu0 %v259
    %287 = vmatprep.subr.mxu0 0.0
    %288 = vmatpush1.msra.mxu0 %v260
    %289 = vmatprep.subr.mxu0 0.0
    %290 = vmatpush1.msra.mxu0 %v261
    %291 = vmatprep.subr.mxu0 0.0
    %292 = vmatpush1.msra.mxu0 %v262
    %293 = vmatprep.subr.mxu0 0.0
    %294 = vmatpush1.msra.mxu0 %v263
    %295 = vmatprep.subr.mxu0 0.0
    %296 = vmatpush1.msra.mxu0 %v264
    %297 = vmatprep.subr.mxu0 0.0
    %298 = vmatpush1.msra.mxu0 %v265
    %299 = vmatprep.subr.mxu0 0.0
    %300 = vmatpush1.msra.mxu0 %v266
    %301 = vmatprep.subr.mxu0 0.0
    %302 = vmatpush1.msra.mxu0 %v267
    %303 = vmatprep.subr.mxu0 0.0
    %304 = vmatpush1.msra.mxu0 %v268
    %305 = vmatprep.subr.mxu0 0.0
    %306 = vmatpush1.msra.mxu0 %v269
    %307 = vmatprep.subr.mxu0 0.0
    %308 = vmatpush1.msra.mxu0 %v270
    %309 = vmatprep.subr.mxu0 0.0
    %310 = vmatpush1.msra.mxu0 %v271
    %311 = vmatprep.subr.mxu0 0.0
    %312 = vmatpush1.msra.mxu0 0.0
    %313 = vmatprep.subr.mxu0 0.0
    %314 = vmatpush1.msra.mxu0 0.0
    %315 = vmatprep.subr.mxu0 0.0
    %316 = vmatpush1.msra.mxu0 0.0
    %317 = vmatprep.subr.mxu0 0.0
    %318 = vmatpush1.msra.mxu0 0.0
    %319 = vmatprep.subr.mxu0 0.0
    %320 = vmatpush1.msra.mxu0 0.0
    %321 = vmatprep.subr.mxu0 0.0
    %322 = vmatpush1.msra.mxu0 0.0
    %323 = vmatprep.subr.mxu0 0.0
    %324 = vmatpush1.msra.mxu0 0.0
    %325 = vmatprep.subr.mxu0 0.0
    %326 = vmatpush1.msra.mxu0 0.0
    %327 = vmatprep.subr.mxu0 0.0
    %328 = vmatpush1.msra.mxu0 0.0
    %329 = vmatprep.subr.mxu0 0.0
    %330 = vmatpush1.msra.mxu0 0.0
    %331 = vmatprep.subr.mxu0 0.0
    %332 = vmatpush1.msra.mxu0 0.0
    %333 = vmatprep.subr.mxu0 0.0
    %334 = vmatpush1.msra.mxu0 0.0
    %335 = vmatprep.subr.mxu0 0.0
    %336 = vmatpush1.msra.mxu0 0.0
    %337 = vmatprep.subr.mxu0 0.0
    %338 = vmatpush1.msra.mxu0 0.0
    %339 = vmatprep.subr.mxu0 0.0
    %340 = vmatpush1.msra.mxu0 0.0
    %341 = vmatprep.subr.mxu0 0.0
    %342 = vmatpush1.msra.mxu0 0.0
    %343 = vmatprep.mubr.f32.mxu0 0.0
    %344 = vmatmul.mubr.f32.gmra.mrb[0].mxu0 %v255
    %v345 = vpop.f32.mrb[0].mxu0
    %v346 = vadd.f32 %v277, %v345
    %v347 = vpop.f32.mrb[0].mxu0
    %348 = vdwg.mxu0
    %v349 = vmax.f32 %v346, 0.0
    %v350 = vld [vmem:[#allocation8] sm:$0xff]
    %v351 = vld [vmem:[#allocation8 + $0x8] sm:$0xff]
    %v352 = vld [vmem:[#allocation8 + $0x10] sm:$0xff]
    %v353 = vld [vmem:[#allocation8 + $0x18] sm:$0xff]
    %v354 = vld [vmem:[#allocation8 + $0x20] sm:$0xff]
    %v355 = vld [vmem:[#allocation8 + $0x28] sm:$0xff]
    %v356 = vld [vmem:[#allocation8 + $0x30] sm:$0xff]
    %v357 = vld [vmem:[#allocation8 + $0x38] sm:$0xff]
    %v358 = vld [vmem:[#allocation8 + $0x40] sm:$0xff]
    %v359 = vld [vmem:[#allocation8 + $0x48] sm:$0xff]
    %v360 = vld [vmem:[#allocation8 + $0x50] sm:$0xff]
    %v361 = vld [vmem:[#allocation8 + $0x58] sm:$0xff]
    %v362 = vld [vmem:[#allocation8 + $0x60] sm:$0xff]
    %v363 = vld [vmem:[#allocation8 + $0x68] sm:$0xff]
    %v364 = vld [vmem:[#allocation8 + $0x70] sm:$0xff]
    %v365 = vld [vmem:[#allocation8 + $0x78] sm:$0xff]
    %v366 = vld [vmem:[#allocation8 + $0x80] sm:$0xff]
    %v367 = vld [vmem:[#allocation8 + $0x88] sm:$0xff]
    %v368 = vld [vmem:[#allocation8 + $0x90] sm:$0xff]
    %v369 = vld [vmem:[#allocation8 + $0x98] sm:$0xff]
    %v370 = vld [vmem:[#allocation8 + $0xa0] sm:$0xff]
    %v371 = vld [vmem:[#allocation8 + $0xa8] sm:$0xff]
    %v372 = vld [vmem:[#allocation8 + $0xb0] sm:$0xff]
    %v373 = vld [vmem:[#allocation8 + $0xb8] sm:$0xff]
    %v374 = vld [vmem:[#allocation8 + $0xc0] sm:$0xff]
    %v375 = vld [vmem:[#allocation8 + $0xc8] sm:$0xff]
    %v376 = vld [vmem:[#allocation8 + $0xd0] sm:$0xff]
    %v377 = vld [vmem:[#allocation8 + $0xd8] sm:$0xff]
    %v378 = vld [vmem:[#allocation8 + $0xe0] sm:$0xff]
    %v379 = vld [vmem:[#allocation8 + $0xe8] sm:$0xff]
    %v380 = vld [vmem:[#allocation8 + $0xf0] sm:$0xff]
    %v381 = vld [vmem:[#allocation8 + $0xf8] sm:$0xff]
    %v382 = vld [vmem:[%s6] sm:$0x3]
    %v384 = vlaneseq
    %v385 = vshrl.u32 %v384, 7
    %v386 = vsub.s32 0, %v385
    %v387 = vrot.slane %v382, %v386
    %v388 = vlaneseq
    %v389 = vshrl.u32 %v388, 7
    %v390 = vsub.s32 1, %v389
    %v391 = vrot.slane %v382, %v390
    %394 = vmatprep.subr.mxu0 %v351
    %395 = vmatpush1.msra.mxu0 %v350
    %396 = vmatprep.subr.mxu0 %v353
    %397 = vmatpush1.msra.mxu0 %v352
    %398 = vmatprep.subr.mxu0 %v355
    %399 = vmatpush1.msra.mxu0 %v354
    %400 = vmatprep.subr.mxu0 %v357
    %401 = vmatpush1.msra.mxu0 %v356
    %402 = vmatprep.subr.mxu0 %v359
    %403 = vmatpush1.msra.mxu0 %v358
    %404 = vmatprep.subr.mxu0 %v361
    %405 = vmatpush1.msra.mxu0 %v360
    %406 = vmatprep.subr.mxu0 %v363
    %407 = vmatpush1.msra.mxu0 %v362
    %408 = vmatprep.subr.mxu0 %v365
    %409 = vmatpush1.msra.mxu0 %v364
    %410 = vmatprep.subr.mxu0 %v367
    %411 = vmatpush1.msra.mxu0 %v366
    %412 = vmatprep.subr.mxu0 %v369
    %413 = vmatpush1.msra.mxu0 %v368
    %414 = vmatprep.subr.mxu0 %v371
    %415 = vmatpush1.msra.mxu0 %v370
    %416 = vmatprep.subr.mxu0 %v373
    %417 = vmatpush1.msra.mxu0 %v372
    %418 = vmatprep.subr.mxu0 %v375
    %419 = vmatpush1.msra.mxu0 %v374
    %420 = vmatprep.subr.mxu0 %v377
    %421 = vmatpush1.msra.mxu0 %v376
    %422 = vmatprep.subr.mxu0 %v379
    %423 = vmatpush1.msra.mxu0 %v378
    %424 = vmatprep.subr.mxu0 %v381
    %425 = vmatpush1.msra.mxu0 %v380
    %426 = vmatprep.subr.mxu0 0.0
    %427 = vmatpush1.msra.mxu0 0.0
    %428 = vmatprep.subr.mxu0 0.0
    %429 = vmatpush1.msra.mxu0 0.0
    %430 = vmatprep.subr.mxu0 0.0
    %431 = vmatpush1.msra.mxu0 0.0
    %432 = vmatprep.subr.mxu0 0.0
    %433 = vmatpush1.msra.mxu0 0.0
    %434 = vmatprep.subr.mxu0 0.0
    %435 = vmatpush1.msra.mxu0 0.0
    %436 = vmatprep.subr.mxu0 0.0
    %437 = vmatpush1.msra.mxu0 0.0
    %438 = vmatprep.subr.mxu0 0.0
    %439 = vmatpush1.msra.mxu0 0.0
    %440 = vmatprep.subr.mxu0 0.0
    %441 = vmatpush1.msra.mxu0 0.0
    %442 = vmatprep.subr.mxu0 0.0
    %443 = vmatpush1.msra.mxu0 0.0
    %444 = vmatprep.subr.mxu0 0.0
    %445 = vmatpush1.msra.mxu0 0.0
    %446 = vmatprep.subr.mxu0 0.0
    %447 = vmatpush1.msra.mxu0 0.0
    %448 = vmatprep.subr.mxu0 0.0
    %449 = vmatpush1.msra.mxu0 0.0
    %450 = vmatprep.subr.mxu0 0.0
    %451 = vmatpush1.msra.mxu0 0.0
    %452 = vmatprep.subr.mxu0 0.0
    %453 = vmatpush1.msra.mxu0 0.0
    %454 = vmatprep.subr.mxu0 0.0
    %455 = vmatpush1.msra.mxu0 0.0
    %456 = vmatprep.subr.mxu0 0.0
    %457 = vmatpush1.msra.mxu0 0.0
    %458 = vmatprep.mubr.f32.mxu0 0.0
    %459 = vmatmul.mubr.f32.gmra.mrb[0].mxu0 %v349
    %v460 = vpop.f32.mrb[0].mxu0
    %v461 = vadd.f32 %v387, %v460
    %v462 = vpop.f32.mrb[0].mxu0
    %v463 = vadd.f32 %v391, %v462
    %464 = vdwg.mxu0
    %v465 = vmul.f32 %v463, 0.5
    %v466 = vmul.f32 %v465, 1.442695
    %v467 = vpow.pop %v466
    %v468 = vld [vmem:[%s7] sm:$0xff]
    %v469 = vmul.f32 %v468, %v467
    %v470 = vadd.f32 %v461, %v469
    %v471 = vld [vmem:[#allocation10] sm:$0xff]
    %v472 = vld [vmem:[#allocation10 + $0x8] sm:$0xff]
    %v473 = vld [vmem:[#allocation10 + $0x10] sm:$0xff]
    %v474 = vld [vmem:[#allocation10 + $0x18] sm:$0xff]
    %v475 = vld [vmem:[#allocation10 + $0x20] sm:$0xff]
    %v476 = vld [vmem:[#allocation10 + $0x28] sm:$0xff]
    %v477 = vld [vmem:[#allocation10 + $0x30] sm:$0xff]
    %v478 = vld [vmem:[#allocation10 + $0x38] sm:$0xff]
    %v479 = vld [vmem:[#allocation10 + $0x40] sm:$0xff]
    %v480 = vld [vmem:[#allocation10 + $0x48] sm:$0xff]
    %v481 = vld [vmem:[#allocation10 + $0x50] sm:$0xff]
    %v482 = vld [vmem:[#allocation10 + $0x58] sm:$0xff]
    %v483 = vld [vmem:[#allocation10 + $0x60] sm:$0xff]
    %v484 = vld [vmem:[#allocation10 + $0x68] sm:$0xff]
    %v485 = vld [vmem:[#allocation10 + $0x70] sm:$0xff]
    %v486 = vld [vmem:[#allocation10 + $0x78] sm:$0xff]
    %v487 = vld [vmem:[%s9] sm:$0x1]
    %v489 = vlaneseq
    %v490 = vshrl.u32 %v489, 7
    %v491 = vsub.s32 0, %v490
    %v492 = vrot.slane %v487, %v491
    %494 = vmatprep.subr.mxu0 0.0
    %495 = vmatpush1.msra.mxu0 %v471
    %496 = vmatprep.subr.mxu0 0.0
    %497 = vmatpush1.msra.mxu0 %v472
    %498 = vmatprep.subr.mxu0 0.0
    %499 = vmatpush1.msra.mxu0 %v473
    %500 = vmatprep.subr.mxu0 0.0
    %501 = vmatpush1.msra.mxu0 %v474
    %502 = vmatprep.subr.mxu0 0.0
    %503 = vmatpush1.msra.mxu0 %v475
    %504 = vmatprep.subr.mxu0 0.0
    %505 = vmatpush1.msra.mxu0 %v476
    %506 = vmatprep.subr.mxu0 0.0
    %507 = vmatpush1.msra.mxu0 %v477
    %508 = vmatprep.subr.mxu0 0.0
    %509 = vmatpush1.msra.mxu0 %v478
    %510 = vmatprep.subr.mxu0 0.0
    %511 = vmatpush1.msra.mxu0 %v479
    %512 = vmatprep.subr.mxu0 0.0
    %513 = vmatpush1.msra.mxu0 %v480
    %514 = vmatprep.subr.mxu0 0.0
    %515 = vmatpush1.msra.mxu0 %v481
    %516 = vmatprep.subr.mxu0 0.0
    %517 = vmatpush1.msra.mxu0 %v482
    %518 = vmatprep.subr.mxu0 0.0
    %519 = vmatpush1.msra.mxu0 %v483
    %520 = vmatprep.subr.mxu0 0.0
    %521 = vmatpush1.msra.mxu0 %v484
    %522 = vmatprep.subr.mxu0 0.0
    %523 = vmatpush1.msra.mxu0 %v485
    %524 = vmatprep.subr.mxu0 0.0
    %525 = vmatpush1.msra.mxu0 %v486
    %526 = vmatprep.subr.mxu0 0.0
    %527 = vmatpush1.msra.mxu0 0.0
    %528 = vmatprep.subr.mxu0 0.0
    %529 = vmatpush1.msra.mxu0 0.0
    %530 = vmatprep.subr.mxu0 0.0
    %531 = vmatpush1.msra.mxu0 0.0
    %532 = vmatprep.subr.mxu0 0.0
    %533 = vmatpush1.msra.mxu0 0.0
    %534 = vmatprep.subr.mxu0 0.0
    %535 = vmatpush1.msra.mxu0 0.0
    %536 = vmatprep.subr.mxu0 0.0
    %537 = vmatpush1.msra.mxu0 0.0
    %538 = vmatprep.subr.mxu0 0.0
    %539 = vmatpush1.msra.mxu0 0.0
    %540 = vmatprep.subr.mxu0 0.0
    %541 = vmatpush1.msra.mxu0 0.0
    %542 = vmatprep.subr.mxu0 0.0
    %543 = vmatpush1.msra.mxu0 0.0
    %544 = vmatprep.subr.mxu0 0.0
    %545 = vmatpush1.msra.mxu0 0.0
    %546 = vmatprep.subr.mxu0 0.0
    %547 = vmatpush1.msra.mxu0 0.0
    %548 = vmatprep.subr.mxu0 0.0
    %549 = vmatpush1.msra.mxu0 0.0
    %550 = vmatprep.subr.mxu0 0.0
    %551 = vmatpush1.msra.mxu0 0.0
    %552 = vmatprep.subr.mxu0 0.0
    %553 = vmatpush1.msra.mxu0 0.0
    %554 = vmatprep.subr.mxu0 0.0
    %555 = vmatpush1.msra.mxu0 0.0
    %556 = vmatprep.subr.mxu0 0.0
    %557 = vmatpush1.msra.mxu0 0.0
    %558 = vmatprep.mubr.f32.mxu0 0.0
    %559 = vmatmul.mubr.f32.gmra.mrb[0].mxu0 %v470
    %v560 = vpop.f32.mrb[0].mxu0
    %v561 = vadd.f32 %v492, %v560
    %v562 = vpop.f32.mrb[0].mxu0
    %563 = vdwg.mxu0
    %v564 = vmax.f32 %v561, 0.0
    %v565 = vld [vmem:[#allocation11] sm:$0xff]
    %v566 = vld [vmem:[#allocation11 + $0x8] sm:$0xff]
    %v567 = vld [vmem:[#allocation11 + $0x10] sm:$0xff]
    %v568 = vld [vmem:[#allocation11 + $0x18] sm:$0xff]
    %v569 = vld [vmem:[#allocation11 + $0x20] sm:$0xff]
    %v570 = vld [vmem:[#allocation11 + $0x28] sm:$0xff]
    %v571 = vld [vmem:[#allocation11 + $0x30] sm:$0xff]
    %v572 = vld [vmem:[#allocation11 + $0x38] sm:$0xff]
    %v573 = vld [vmem:[#allocation11 + $0x40] sm:$0xff]
    %v574 = vld [vmem:[#allocation11 + $0x48] sm:$0xff]
    %v575 = vld [vmem:[#allocation11 + $0x50] sm:$0xff]
    %v576 = vld [vmem:[#allocation11 + $0x58] sm:$0xff]
    %v577 = vld [vmem:[#allocation11 + $0x60] sm:$0xff]
    %v578 = vld [vmem:[#allocation11 + $0x68] sm:$0xff]
    %v579 = vld [vmem:[#allocation11 + $0x70] sm:$0xff]
    %v580 = vld [vmem:[#allocation11 + $0x78] sm:$0xff]
    %v581 = vld [vmem:[%s11] sm:$0x1]
    %v583 = vlaneseq
    %v584 = vshrl.u32 %v583, 7
    %v585 = vsub.s32 0, %v584
    %v586 = vrot.slane %v581, %v585
    %588 = vmatprep.subr.mxu0 0.0
    %589 = vmatpush1.msra.mxu0 %v565
    %590 = vmatprep.subr.mxu0 0.0
    %591 = vmatpush1.msra.mxu0 %v566
    %592 = vmatprep.subr.mxu0 0.0
    %593 = vmatpush1.msra.mxu0 %v567
    %594 = vmatprep.subr.mxu0 0.0
    %595 = vmatpush1.msra.mxu0 %v568
    %596 = vmatprep.subr.mxu0 0.0
    %597 = vmatpush1.msra.mxu0 %v569
    %598 = vmatprep.subr.mxu0 0.0
    %599 = vmatpush1.msra.mxu0 %v570
    %600 = vmatprep.subr.mxu0 0.0
    %601 = vmatpush1.msra.mxu0 %v571
    %602 = vmatprep.subr.mxu0 0.0
    %603 = vmatpush1.msra.mxu0 %v572
    %604 = vmatprep.subr.mxu0 0.0
    %605 = vmatpush1.msra.mxu0 %v573
    %606 = vmatprep.subr.mxu0 0.0
    %607 = vmatpush1.msra.mxu0 %v574
    %608 = vmatprep.subr.mxu0 0.0
    %609 = vmatpush1.msra.mxu0 %v575
    %610 = vmatprep.subr.mxu0 0.0
    %611 = vmatpush1.msra.mxu0 %v576
    %612 = vmatprep.subr.mxu0 0.0
    %613 = vmatpush1.msra.mxu0 %v577
    %614 = vmatprep.subr.mxu0 0.0
    %615 = vmatpush1.msra.mxu0 %v578
    %616 = vmatprep.subr.mxu0 0.0
    %617 = vmatpush1.msra.mxu0 %v579
    %618 = vmatprep.subr.mxu0 0.0
    %619 = vmatpush1.msra.mxu0 %v580
    %620 = vmatprep.subr.mxu0 0.0
    %621 = vmatpush1.msra.mxu0 0.0
    %622 = vmatprep.subr.mxu0 0.0
    %623 = vmatpush1.msra.mxu0 0.0
    %624 = vmatprep.subr.mxu0 0.0
    %625 = vmatpush1.msra.mxu0 0.0
    %626 = vmatprep.subr.mxu0 0.0
    %627 = vmatpush1.msra.mxu0 0.0
    %628 = vmatprep.subr.mxu0 0.0
    %629 = vmatpush1.msra.mxu0 0.0
    %630 = vmatprep.subr.mxu0 0.0
    %631 = vmatpush1.msra.mxu0 0.0
    %632 = vmatprep.subr.mxu0 0.0
    %633 = vmatpush1.msra.mxu0 0.0
    %634 = vmatprep.subr.mxu0 0.0
    %635 = vmatpush1.msra.mxu0 0.0
    %636 = vmatprep.subr.mxu0 0.0
    %637 = vmatpush1.msra.mxu0 0.0
    %638 = vmatprep.subr.mxu0 0.0
    %639 = vmatpush1.msra.mxu0 0.0
    %640 = vmatprep.subr.mxu0 0.0
    %641 = vmatpush1.msra.mxu0 0.0
    %642 = vmatprep.subr.mxu0 0.0
    %643 = vmatpush1.msra.mxu0 0.0
    %644 = vmatprep.subr.mxu0 0.0
    %645 = vmatpush1.msra.mxu0 0.0
    %646 = vmatprep.subr.mxu0 0.0
    %647 = vmatpush1.msra.mxu0 0.0
    %648 = vmatprep.subr.mxu0 0.0
    %649 = vmatpush1.msra.mxu0 0.0
    %650 = vmatprep.subr.mxu0 0.0
    %651 = vmatpush1.msra.mxu0 0.0
    %652 = vmatprep.mubr.f32.mxu0 0.0
    %653 = vmatmul.mubr.f32.gmra.mrb[0].mxu0 %v564
    %v654 = vpop.f32.mrb[0].mxu0
    %v655 = vadd.f32 %v586, %v654
    %v656 = vpop.f32.mrb[0].mxu0
    %657 = vdwg.mxu0
    %v658 = vmax.f32 %v655, 0.0
    %v659 = vld [vmem:[#allocation13] sm:$0xff]
    %v660 = vld [vmem:[#allocation13 + $0x8] sm:$0xff]
    %v661 = vld [vmem:[#allocation13 + $0x10] sm:$0xff]
    %v662 = vld [vmem:[#allocation13 + $0x18] sm:$0xff]
    %v663 = vld [vmem:[#allocation13 + $0x20] sm:$0xff]
    %v664 = vld [vmem:[#allocation13 + $0x28] sm:$0xff]
    %v665 = vld [vmem:[#allocation13 + $0x30] sm:$0xff]
    %v666 = vld [vmem:[#allocation13 + $0x38] sm:$0xff]
    %v667 = vld [vmem:[#allocation13 + $0x40] sm:$0xff]
    %v668 = vld [vmem:[#allocation13 + $0x48] sm:$0xff]
    %v669 = vld [vmem:[#allocation13 + $0x50] sm:$0xff]
    %v670 = vld [vmem:[#allocation13 + $0x58] sm:$0xff]
    %v671 = vld [vmem:[#allocation13 + $0x60] sm:$0xff]
    %v672 = vld [vmem:[#allocation13 + $0x68] sm:$0xff]
    %v673 = vld [vmem:[#allocation13 + $0x70] sm:$0xff]
    %v674 = vld [vmem:[#allocation13 + $0x78] sm:$0xff]
    %v675 = vld [vmem:[#allocation13 + $0x80] sm:$0xff]
    %v676 = vld [vmem:[#allocation13 + $0x88] sm:$0xff]
    %v677 = vld [vmem:[#allocation13 + $0x90] sm:$0xff]
    %v678 = vld [vmem:[#allocation13 + $0x98] sm:$0xff]
    %v679 = vld [vmem:[#allocation13 + $0xa0] sm:$0xff]
    %v680 = vld [vmem:[#allocation13 + $0xa8] sm:$0xff]
    %v681 = vld [vmem:[#allocation13 + $0xb0] sm:$0xff]
    %v682 = vld [vmem:[#allocation13 + $0xb8] sm:$0xff]
    %v683 = vld [vmem:[#allocation13 + $0xc0] sm:$0xff]
    %v684 = vld [vmem:[#allocation13 + $0xc8] sm:$0xff]
    %v685 = vld [vmem:[#allocation13 + $0xd0] sm:$0xff]
    %v686 = vld [vmem:[#allocation13 + $0xd8] sm:$0xff]
    %v687 = vld [vmem:[#allocation13 + $0xe0] sm:$0xff]
    %v688 = vld [vmem:[#allocation13 + $0xe8] sm:$0xff]
    %v689 = vld [vmem:[#allocation13 + $0xf0] sm:$0xff]
    %v690 = vld [vmem:[#allocation13 + $0xf8] sm:$0xff]
    %v691 = vld [vmem:[%s13] sm:$0x3]
    %v693 = vlaneseq
    %v694 = vshrl.u32 %v693, 7
    %v695 = vsub.s32 0, %v694
    %v696 = vrot.slane %v691, %v695
    %v697 = vlaneseq
    %v698 = vshrl.u32 %v697, 7
    %v699 = vsub.s32 1, %v698
    %v700 = vrot.slane %v691, %v699
    %703 = vmatprep.subr.mxu0 %v660
    %704 = vmatpush1.msra.mxu0 %v659
    %705 = vmatprep.subr.mxu0 %v662
    %706 = vmatpush1.msra.mxu0 %v661
    %707 = vmatprep.subr.mxu0 %v664
    %708 = vmatpush1.msra.mxu0 %v663
    %709 = vmatprep.subr.mxu0 %v666
    %710 = vmatpush1.msra.mxu0 %v665
    %711 = vmatprep.subr.mxu0 %v668
    %712 = vmatpush1.msra.mxu0 %v667
    %713 = vmatprep.subr.mxu0 %v670
    %714 = vmatpush1.msra.mxu0 %v669
    %715 = vmatprep.subr.mxu0 %v672
    %716 = vmatpush1.msra.mxu0 %v671
    %717 = vmatprep.subr.mxu0 %v674
    %718 = vmatpush1.msra.mxu0 %v673
    %719 = vmatprep.subr.mxu0 %v676
    %720 = vmatpush1.msra.mxu0 %v675
    %721 = vmatprep.subr.mxu0 %v678
    %722 = vmatpush1.msra.mxu0 %v677
    %723 = vmatprep.subr.mxu0 %v680
    %724 = vmatpush1.msra.mxu0 %v679
    %725 = vmatprep.subr.mxu0 %v682
    %726 = vmatpush1.msra.mxu0 %v681
    %727 = vmatprep.subr.mxu0 %v684
    %728 = vmatpush1.msra.mxu0 %v683
    %729 = vmatprep.subr.mxu0 %v686
    %730 = vmatpush1.msra.mxu0 %v685
    %731 = vmatprep.subr.mxu0 %v688
    %732 = vmatpush1.msra.mxu0 %v687
    %733 = vmatprep.subr.mxu0 %v690
    %734 = vmatpush1.msra.mxu0 %v689
    %735 = vmatprep.subr.mxu0 0.0
    %736 = vmatpush1.msra.mxu0 0.0
    %737 = vmatprep.subr.mxu0 0.0
    %738 = vmatpush1.msra.mxu0 0.0
    %739 = vmatprep.subr.mxu0 0.0
    %740 = vmatpush1.msra.mxu0 0.0
    %741 = vmatprep.subr.mxu0 0.0
    %742 = vmatpush1.msra.mxu0 0.0
    %743 = vmatprep.subr.mxu0 0.0
    %744 = vmatpush1.msra.mxu0 0.0
    %745 = vmatprep.subr.mxu0 0.0
    %746 = vmatpush1.msra.mxu0 0.0
    %747 = vmatprep.subr.mxu0 0.0
    %748 = vmatpush1.msra.mxu0 0.0
    %749 = vmatprep.subr.mxu0 0.0
    %750 = vmatpush1.msra.mxu0 0.0
    %751 = vmatprep.subr.mxu0 0.0
    %752 = vmatpush1.msra.mxu0 0.0
    %753 = vmatprep.subr.mxu0 0.0
    %754 = vmatpush1.msra.mxu0 0.0
    %755 = vmatprep.subr.mxu0 0.0
    %756 = vmatpush1.msra.mxu0 0.0
    %757 = vmatprep.subr.mxu0 0.0
    %758 = vmatpush1.msra.mxu0 0.0
    %759 = vmatprep.subr.mxu0 0.0
    %760 = vmatpush1.msra.mxu0 0.0
    %761 = vmatprep.subr.mxu0 0.0
    %762 = vmatpush1.msra.mxu0 0.0
    %763 = vmatprep.subr.mxu0 0.0
    %764 = vmatpush1.msra.mxu0 0.0
    %765 = vmatprep.subr.mxu0 0.0
    %766 = vmatpush1.msra.mxu0 0.0
    %767 = vmatprep.mubr.f32.mxu0 0.0
    %768 = vmatmul.mubr.f32.gmra.mrb[0].mxu0 %v658
    %v769 = vpop.f32.mrb[0].mxu0
    %v770 = vadd.f32 %v696, %v769
    %v771 = vpop.f32.mrb[0].mxu0
    %v772 = vadd.f32 %v700, %v771
    %773 = vdwg.mxu0
    %v774 = vxor.u32 %v770, 2147483648
    %v775 = vxor.u32 %v772, 2147483648
    %v776 = vmul.f32 %v774, 1.442695
    %v777 = vpow.pop %v776
    %v778 = vmul.f32 %v775, 1.442695
    %v779 = vpow.pop %v778
    %v780 = vadd.f32 %v777, 1.0
    %v781 = vadd.f32 %v779, 1.0
    %v782 = vrcp.pop %v780
    %v783 = vmul.f32 1.0, %v782
    %v784 = vrcp.pop %v781
    %v785 = vmul.f32 1.0, %v784
    %786 = vst [vmem:[#allocation14] sm:$0xff] %v783
    %787 = vst [vmem:[#allocation14 + $0x8] sm:$0xff] %v785
    %788 = vst [vmem:[#allocation15] sm:$0xff] %v461
    %789 = vst [vmem:[#allocation15 + $0x8] sm:$0xff] %v463
    // Predicated region
    $region86: #{tpu_custom_call.1} parent=1 // pred_check
      _
    $region87: #{tpu_custom_call.1} parent=1 // pred_check_branch
      %791 = sbr.rel (0) target = $region89
    $region88: #{tpu_custom_call.1} parent=1 // pred_region
      %s793 = ssub.s32 256, 256
      %794 = vsyncadd [#allocation4], %s793
      %s796 = sshll.u32 [#allocation14], 4
      %s797 = int_to_ptr.vmem [resolvable:$true] %s796
      %799 = dma.vmem_to_hbm [thread:$0]  %s797, 256, %s14, [#allocation4]
    $region89: #{tpu_custom_call.1} parent=1 // pred_fallthru
      _
    // Predicated region
    $region90: #{tpu_custom_call.1} parent=1 // pred_check
      _
    $region91: #{tpu_custom_call.1} parent=1 // pred_check_branch
      %801 = sbr.rel (0) target = $region93
    $region92: #{tpu_custom_call.1} parent=1 // pred_region
      %s803 = ssub.s32 256, 256
      %804 = vsyncadd [#allocation16], %s803
      %s806 = sshll.u32 [#allocation15], 4
      %s807 = int_to_ptr.vmem [resolvable:$true] %s806
      %809 = dma.vmem_to_hbm [thread:$0]  %s807, 256, %s15, [#allocation16]
    $region93: #{tpu_custom_call.1} parent=1 // pred_fallthru
      _
    // Predicated region
    $region94: #{tpu_custom_call.1} parent=1 // pred_check
      _
    $region95: #{tpu_custom_call.1} parent=1 // pred_check_branch
      %811 = sbr.rel (0) target = $region97
    $region96: #{tpu_custom_call.1} parent=1 // pred_region
      %812 = dma.done [#allocation4], 256
    $region97: #{tpu_custom_call.1} parent=1 // pred_fallthru
      _
    // Predicated region
    $region98: #{tpu_custom_call.1} parent=1 // pred_check
      _
    $region99: #{tpu_custom_call.1} parent=1 // pred_check_branch
      %814 = sbr.rel (0) target = $region101
    $region100: #{tpu_custom_call.1} parent=1 // pred_region
      %815 = dma.done [#allocation16], 256
    $region101: #{tpu_custom_call.1} parent=1 // pred_fallthru
      _
    %816 = vsyncpa [#allocation3], 1
    %817 = vsyncpa [#allocation6], 1
    %818 = vsyncpa [#allocation9], 1
    %819 = vsyncpa [#allocation12], 1
    %820 = vsyncpa [#allocation4], 1
    %821 = vsyncpa [#allocation16], 1

</llo_original>
